<compile_context>
chip_gen: v7x
topology: tpu7x:2x2x1
jax: 0.10.0
libtpu: 0.0.40
codegen_flags: <defaults>
</compile_context>

<pallas_src>
import jax
import jax.numpy as jnp
from jax.experimental import pallas as pl
from jax.experimental.pallas import tpu as pltpu

_NEG_SLOPE = 0.1


def _leaky_relu(x):
    return jnp.where(x > 0, x, _NEG_SLOPE * x)


def _round_up(n, m):
    return ((n + m - 1) // m) * m


def _pad_axis(a, axis, new_size):
    pad = new_size - a.shape[axis]
    if pad == 0:
        return a
    widths = [(0, 0)] * a.ndim
    widths[axis] = (0, pad)
    return jnp.pad(a, widths)


def _make_g_feat_kernel(n_embs):
    """Kernel refs: n_embs * (x, w1t, b1), then w2t, b2, w3t, b3, out."""

    def kernel(*refs):
        per_emb = [refs[3 * e:3 * e + 3] for e in range(n_embs)]
        w2_ref, b2_ref, w3_ref, b3_ref, o_ref = refs[3 * n_embs:]

        # Per-embedding input branch + running elementwise max (stack+max fused).
        h = None
        for x_ref, w1_ref, b1_ref in per_emb:
            acc = jnp.dot(x_ref[...], w1_ref[...],
                          preferred_element_type=jnp.float32)
            h_e = _leaky_relu(acc + b1_ref[...])            # f32 elementwise
            h = h_e if h is None else jnp.maximum(h, h_e)

        # lays: Linear -> LeakyReLU -> Linear -> ReLU
        a2 = jnp.dot(h.astype(w2_ref.dtype), w2_ref[...],
                     preferred_element_type=jnp.float32) + b2_ref[...]
        a2 = _leaky_relu(a2)
        a3 = jnp.dot(a2.astype(w3_ref.dtype), w3_ref[...],
                     preferred_element_type=jnp.float32) + b3_ref[...]
        o_ref[...] = jnp.maximum(a3, 0.0).astype(o_ref.dtype)

    return kernel


def g_feat_forward(class_embs, zs, params, *, tile_m=None):
    """G_Feat forward.

    class_embs: list of (B, emb_e) arrays
    zs:         list of (B, emb_e) noise arrays (torch.randn equivalent)
    params:     dict with PyTorch-Linear-layout parameters:
                "w1": list of (H0, 2*emb_e), "b1": list of (H0,)
                "w2": (H1, H0), "b2": (H1,), "w3": (F, H1), "b3": (F,)
    returns (B, F) float32
    """
    n_embs = len(class_embs)
    B = class_embs[0].shape[0]
    H0 = params["w1"][0].shape[0]
    H1 = params["w2"].shape[0]
    F = params["w3"].shape[0]

    # Lane-dense padding for all hidden/output feature dims (128 granule).
    # (If real dims sit near multiples of 256, padding to 256 better fills the
    #  v6e/v7x 256-wide MXU pass; for exact-128 dims keep 128.)
    H0p, H1p, Fp = _round_up(H0, 128), _round_up(H1, 128), _round_up(F, 128)

    # Batch tile:
    #   * >= 16 rows so bf16 LHS tiles fill packed vregs (16 sublanes / vreg)
    #   * up to 512 rows to amortize the ~0.35us per-grid-step cost (v5e/v6e)
    #   * for larger batches aim for >= 2 grid steps so v7x's 2 TCs both run.
    if tile_m is None:
        bp16 = _round_up(B, 16)
        if bp16 <= 32:
            tile_m = bp16                                   # tiny batch: one tile
        else:
            tile_m = min(512, _round_up(-(-bp16 // 2), 16))  # >= 2 steps
    Bp = _round_up(B, tile_m)

    compute_dtype = jnp.bfloat16  # MXU-native inputs, f32 accumulation.
    # Constant-index blocks never change across the grid: single-buffer them.
    resident = dict(pipeline_mode=pl.Buffered(1))

    inputs, in_specs = [], []
    flops = 0
    weight_bytes = 0      # resident, single-buffered
    stream_bytes = 0      # per-step, double-buffered
    for e in range(n_embs):
        emb = class_embs[e].shape[1]
        # Wrapper-side concat [Z, C] -> one full-K (2*emb) matmul per branch.
        x = jnp.concatenate([zs[e].astype(jnp.float32),
                             class_embs[e].astype(jnp.float32)], axis=1)
        x = _pad_axis(x, 0, Bp)                                      # (Bp, 2*emb)
        w1t = _pad_axis(params["w1"][e].T.astype(jnp.float32), 1, H0p)  # (2*emb, H0p)
        b1 = _pad_axis(params["b1"][e].reshape(1, H0).astype(jnp.float32), 1, H0p)

        inputs += [x.astype(compute_dtype), w1t.astype(compute_dtype), b1]
        in_specs += [
            pl.BlockSpec((tile_m, 2 * emb), lambda i: (i, 0)),           # X tile
            pl.BlockSpec((2 * emb, H0p), lambda i: (0, 0), **resident),  # weight
            pl.BlockSpec((1, H0p), lambda i: (0, 0), **resident),        # bias
        ]
        flops += 2 * Bp * (2 * emb) * H0p
        stream_bytes += tile_m * (2 * emb) * 2
        weight_bytes += (2 * emb) * H0p * 2 + H0p * 4

    w2t = _pad_axis(_pad_axis(params["w2"].T.astype(jnp.float32), 0, H0p), 1, H1p)
    b2 = _pad_axis(params["b2"].reshape(1, H1).astype(jnp.float32), 1, H1p)
    w3t = _pad_axis(_pad_axis(params["w3"].T.astype(jnp.float32), 0, H1p), 1, Fp)
    b3 = _pad_axis(params["b3"].reshape(1, F).astype(jnp.float32), 1, Fp)
    inputs += [w2t.astype(compute_dtype), b2, w3t.astype(compute_dtype), b3]
    in_specs += [
        pl.BlockSpec((H0p, H1p), lambda i: (0, 0), **resident),
        pl.BlockSpec((1, H1p), lambda i: (0, 0), **resident),
        pl.BlockSpec((H1p, Fp), lambda i: (0, 0), **resident),
        pl.BlockSpec((1, Fp), lambda i: (0, 0), **resident),
    ]
    flops += 2 * Bp * (H0p * H1p + H1p * Fp)
    weight_bytes += H0p * H1p * 2 + H1p * 4 + H1p * Fp * 2 + Fp * 4

    # Explicit VMEM budget (critical on v7x: 64 MiB physical / 32 MiB default
    # scoped). If this approaches ~48-56 MiB, shrink tile_m or tile F/H1 on an
    # extra grid axis instead of relying on the default limit.
    out_tile_bytes = tile_m * Fp * 4
    interm_bytes = tile_m * (H0p + H1p + Fp) * 4
    vmem_estimate = (weight_bytes + 2 * stream_bytes + 2 * out_tile_bytes
                     + 3 * interm_bytes)
    vmem_limit = int(min(max(2 * vmem_estimate, 16 << 20), 100 << 20))

    bytes_accessed = sum(int(a.size) * a.dtype.itemsize for a in inputs)
    bytes_accessed += Bp * Fp * 4

    out = pl.pallas_call(
        _make_g_feat_kernel(n_embs),
        out_shape=jax.ShapeDtypeStruct((Bp, Fp), jnp.float32),
        grid=(Bp // tile_m,),
        in_specs=in_specs,
        out_specs=pl.BlockSpec((tile_m, Fp), lambda i: (i, 0)),
        compiler_params=pltpu.CompilerParams(
            dimension_semantics=("parallel",),
            vmem_limit_bytes=vmem_limit),
        cost_estimate=pl.CostEstimate(
            flops=flops, transcendentals=0, bytes_accessed=bytes_accessed),
    )(*inputs)

    if Bp == B and Fp == F:
        return out
    return out[:B, :F]


def g_feat_reference(class_embs, zs, params):
    """Pure-JAX reference mirroring the kernel's bf16-input / f32-accum matmuls."""
    cd = jnp.bfloat16
    hs = []
    for e in range(len(class_embs)):
        x = jnp.concatenate([zs[e], class_embs[e]], axis=1)
        a = jnp.dot(x.astype(cd), params["w1"][e].T.astype(cd),
                    preferred_element_type=jnp.float32) + params["b1"][e]
        hs.append(jnp.where(a > 0, a, _NEG_SLOPE * a))
    h = jnp.stack(hs, axis=2).max(axis=2)
    a2 = jnp.dot(h.astype(cd), params["w2"].T.astype(cd),
                 preferred_element_type=jnp.float32) + params["b2"]
    a2 = jnp.where(a2 > 0, a2, _NEG_SLOPE * a2)
    a3 = jnp.dot(a2.astype(cd), params["w3"].T.astype(cd),
                 preferred_element_type=jnp.float32) + params["b3"]
    return jnp.maximum(a3, 0.0)


if __name__ == "__main__":
    # Scaled-down G_Feat: emb_size=[64, 64], dimHid=[128, 256], feat_size=128.
    emb_size = [64, 64]
    dimHid = [128, 256]
    feat_size = 128
    batch = 8
    H0, H1, F = dimHid[0], dimHid[1], feat_size

    key = jax.random.PRNGKey(0)
    keys = jax.random.split(key, 4 * len(emb_size) + 4)
    k = iter(keys)

    class_embs, zs, w1_list, b1_list = [], [], [], []
    for emb in emb_size:
        class_embs.append(jax.random.normal(next(k), (batch, emb), jnp.float32))
        # torch.randn noise generated wrapper-side (deterministic) instead of in-kernel.
        zs.append(jax.random.normal(next(k), (batch, emb), jnp.float32))
        w1_list.append(jax.random.normal(next(k), (H0, 2 * emb), jnp.float32) * 0.05)
        b1_list.append(jax.random.normal(next(k), (H0,), jnp.float32) * 0.05)

    params = {
        "w1": w1_list,
        "b1": b1_list,
        "w2": jax.random.normal(next(k), (H1, H0), jnp.float32) * 0.05,
        "b2": jax.random.normal(next(k), (H1,), jnp.float32) * 0.05,
        "w3": jax.random.normal(next(k), (F, H1), jnp.float32) * 0.05,
        "b3": jax.random.normal(next(k), (F,), jnp.float32) * 0.05,
    }

    out = g_feat_forward(class_embs, zs, params)
    out = jax.block_until_ready(out)

    ref = g_feat_reference(class_embs, zs, params)
    assert out.shape == (batch, feat_size)
    # Kernel and reference now both do single full-K bf16 matmuls with f32
    # accumulation; only accumulation-order noise remains.
    assert jnp.allclose(out, ref, atol=1e-3, rtol=1e-3), float(jnp.max(jnp.abs(out - ref)))

    print("KERNEL_OK")
</pallas_src>

<mosaic_0001>
module attributes {stable_mosaic.version = 11 : i64} {
  func.func @kernel(%arg0: i32, %arg1: memref<16x128xbf16, #tpu.memory_space<vmem>>, %arg2: memref<128x128xbf16, #tpu.memory_space<vmem>>, %arg3: memref<1x128xf32, #tpu.memory_space<vmem>>, %arg4: memref<16x128xbf16, #tpu.memory_space<vmem>>, %arg5: memref<128x128xbf16, #tpu.memory_space<vmem>>, %arg6: memref<1x128xf32, #tpu.memory_space<vmem>>, %arg7: memref<128x256xbf16, #tpu.memory_space<vmem>>, %arg8: memref<1x256xf32, #tpu.memory_space<vmem>>, %arg9: memref<256x128xbf16, #tpu.memory_space<vmem>>, %arg10: memref<1x128xf32, #tpu.memory_space<vmem>>, %arg11: memref<16x128xf32, #tpu.memory_space<vmem>>) attributes {dimension_semantics = [#tpu.dimension_semantics<parallel>], iteration_bounds = array<i64: 1>, scalar_prefetch = 0 : i64, scratch_operands = 0 : i64, tpu.core_type = #tpu.core_type<tc>, window_params = [{transform_indices = @transform_0, window_bounds = array<i64: 16, 128>}, {pipeline_mode = #tpu.pipeline_mode<synchronous>, transform_indices = @transform_1, window_bounds = array<i64: 128, 128>}, {pipeline_mode = #tpu.pipeline_mode<synchronous>, transform_indices = @transform_2, window_bounds = array<i64: 1, 128>}, {transform_indices = @transform_3, window_bounds = array<i64: 16, 128>}, {pipeline_mode = #tpu.pipeline_mode<synchronous>, transform_indices = @transform_4, window_bounds = array<i64: 128, 128>}, {pipeline_mode = #tpu.pipeline_mode<synchronous>, transform_indices = @transform_5, window_bounds = array<i64: 1, 128>}, {pipeline_mode = #tpu.pipeline_mode<synchronous>, transform_indices = @transform_6, window_bounds = array<i64: 128, 256>}, {pipeline_mode = #tpu.pipeline_mode<synchronous>, transform_indices = @transform_7, window_bounds = array<i64: 1, 256>}, {pipeline_mode = #tpu.pipeline_mode<synchronous>, transform_indices = @transform_8, window_bounds = array<i64: 256, 128>}, {pipeline_mode = #tpu.pipeline_mode<synchronous>, transform_indices = @transform_9, window_bounds = array<i64: 1, 128>}, {transform_indices = @transform_10, window_bounds = array<i64: 16, 128>}]} {
    %c0 = arith.constant 0 : index
    %c0_0 = arith.constant 0 : index
    %0 = vector.load %arg1[%c0, %c0_0] : memref<16x128xbf16, #tpu.memory_space<vmem>>, vector<16x128xbf16>
    %c0_1 = arith.constant 0 : index
    %c0_2 = arith.constant 0 : index
    %1 = vector.load %arg2[%c0_1, %c0_2] : memref<128x128xbf16, #tpu.memory_space<vmem>>, vector<128x128xbf16>
    %cst = arith.constant dense<0.000000e+00> : vector<16x128xf32>
    %2 = tpu.matmul %0, %1, %cst {dimension_numbers = #tpu.dot_dimension_numbers<[1], [0], [0], [1], [0, 0, 1, 1], [], []>} : vector<16x128xbf16>, vector<128x128xbf16>, vector<16x128xf32> -> vector<16x128xf32>
    %c0_3 = arith.constant 0 : index
    %c0_4 = arith.constant 0 : index
    %3 = vector.load %arg3[%c0_3, %c0_4] : memref<1x128xf32, #tpu.memory_space<vmem>>, vector<1x128xf32>
    %4 = vector.broadcast %3 : vector<1x128xf32> to vector<16x128xf32>
    %5 = arith.addf %2, %4 : vector<16x128xf32>
    %cst_5 = arith.constant 0.000000e+00 : f32
    %6 = vector.broadcast %cst_5 : f32 to vector<16x128xf32>
    %7 = arith.cmpf ogt, %5, %6 : vector<16x128xf32>
    %cst_6 = arith.constant 1.000000e-01 : f32
    %8 = vector.broadcast %cst_6 : f32 to vector<16x128xf32>
    %9 = arith.mulf %8, %5 : vector<16x128xf32>
    %10 = arith.select %7, %5, %9 : vector<16x128xi1>, vector<16x128xf32>
    %c0_7 = arith.constant 0 : index
    %c0_8 = arith.constant 0 : index
    %11 = vector.load %arg4[%c0_7, %c0_8] : memref<16x128xbf16, #tpu.memory_space<vmem>>, vector<16x128xbf16>
    %c0_9 = arith.constant 0 : index
    %c0_10 = arith.constant 0 : index
    %12 = vector.load %arg5[%c0_9, %c0_10] : memref<128x128xbf16, #tpu.memory_space<vmem>>, vector<128x128xbf16>
    %cst_11 = arith.constant dense<0.000000e+00> : vector<16x128xf32>
    %13 = tpu.matmul %11, %12, %cst_11 {dimension_numbers = #tpu.dot_dimension_numbers<[1], [0], [0], [1], [0, 0, 1, 1], [], []>} : vector<16x128xbf16>, vector<128x128xbf16>, vector<16x128xf32> -> vector<16x128xf32>
    %c0_12 = arith.constant 0 : index
    %c0_13 = arith.constant 0 : index
    %14 = vector.load %arg6[%c0_12, %c0_13] : memref<1x128xf32, #tpu.memory_space<vmem>>, vector<1x128xf32>
    %15 = vector.broadcast %14 : vector<1x128xf32> to vector<16x128xf32>
    %16 = arith.addf %13, %15 : vector<16x128xf32>
    %cst_14 = arith.constant 0.000000e+00 : f32
    %17 = vector.broadcast %cst_14 : f32 to vector<16x128xf32>
    %18 = arith.cmpf ogt, %16, %17 : vector<16x128xf32>
    %cst_15 = arith.constant 1.000000e-01 : f32
    %19 = vector.broadcast %cst_15 : f32 to vector<16x128xf32>
    %20 = arith.mulf %19, %16 : vector<16x128xf32>
    %21 = arith.select %18, %16, %20 : vector<16x128xi1>, vector<16x128xf32>
    %22 = arith.maximumf %10, %21 : vector<16x128xf32>
    %23 = arith.truncf %22 : vector<16x128xf32> to vector<16x128xbf16>
    %c0_16 = arith.constant 0 : index
    %c0_17 = arith.constant 0 : index
    %24 = vector.load %arg7[%c0_16, %c0_17] : memref<128x256xbf16, #tpu.memory_space<vmem>>, vector<128x256xbf16>
    %cst_18 = arith.constant dense<0.000000e+00> : vector<16x256xf32>
    %25 = tpu.matmul %23, %24, %cst_18 {dimension_numbers = #tpu.dot_dimension_numbers<[1], [0], [0], [1], [0, 0, 1, 1], [], []>} : vector<16x128xbf16>, vector<128x256xbf16>, vector<16x256xf32> -> vector<16x256xf32>
    %c0_19 = arith.constant 0 : index
    %c0_20 = arith.constant 0 : index
    %26 = vector.load %arg8[%c0_19, %c0_20] : memref<1x256xf32, #tpu.memory_space<vmem>>, vector<1x256xf32>
    %27 = vector.broadcast %26 : vector<1x256xf32> to vector<16x256xf32>
    %28 = arith.addf %25, %27 : vector<16x256xf32>
    %cst_21 = arith.constant 0.000000e+00 : f32
    %29 = vector.broadcast %cst_21 : f32 to vector<16x256xf32>
    %30 = arith.cmpf ogt, %28, %29 : vector<16x256xf32>
    %cst_22 = arith.constant 1.000000e-01 : f32
    %31 = vector.broadcast %cst_22 : f32 to vector<16x256xf32>
    %32 = arith.mulf %31, %28 : vector<16x256xf32>
    %33 = arith.select %30, %28, %32 : vector<16x256xi1>, vector<16x256xf32>
    %34 = arith.truncf %33 : vector<16x256xf32> to vector<16x256xbf16>
    %c0_23 = arith.constant 0 : index
    %c0_24 = arith.constant 0 : index
    %35 = vector.load %arg9[%c0_23, %c0_24] : memref<256x128xbf16, #tpu.memory_space<vmem>>, vector<256x128xbf16>
    %cst_25 = arith.constant dense<0.000000e+00> : vector<16x128xf32>
    %36 = tpu.matmul %34, %35, %cst_25 {dimension_numbers = #tpu.dot_dimension_numbers<[1], [0], [0], [1], [0, 0, 1, 1], [], []>} : vector<16x256xbf16>, vector<256x128xbf16>, vector<16x128xf32> -> vector<16x128xf32>
    %c0_26 = arith.constant 0 : index
    %c0_27 = arith.constant 0 : index
    %37 = vector.load %arg10[%c0_26, %c0_27] : memref<1x128xf32, #tpu.memory_space<vmem>>, vector<1x128xf32>
    %38 = vector.broadcast %37 : vector<1x128xf32> to vector<16x128xf32>
    %39 = arith.addf %36, %38 : vector<16x128xf32>
    %cst_28 = arith.constant 0.000000e+00 : f32
    %40 = vector.broadcast %cst_28 : f32 to vector<16x128xf32>
    %41 = arith.maximumf %39, %40 : vector<16x128xf32>
    %c0_29 = arith.constant 0 : index
    %c0_30 = arith.constant 0 : index
    %42 = vector.load %arg11[%c0_29, %c0_30] : memref<16x128xf32, #tpu.memory_space<vmem>>, vector<16x128xf32>
    tpu.vector_store %arg11[%c0_29, %c0_30], %41 {strides = array<i32>} : memref<16x128xf32, #tpu.memory_space<vmem>>, vector<16x128xf32>,
    return
  }
  func.func @transform_0(%arg0: i32) -> (i32, i32) {
    %c0_i32 = arith.constant 0 : i32
    %c0_i32_0 = arith.constant 0 : i32
    return %arg0, %c0_i32 : i32, i32
  }
  func.func @transform_1(%arg0: i32) -> (i32, i32) {
    %c0_i32 = arith.constant 0 : i32
    %c0_i32_0 = arith.constant 0 : i32
    %c0_i32_1 = arith.constant 0 : i32
    return %c0_i32, %c0_i32_0 : i32, i32
  }
  func.func @transform_2(%arg0: i32) -> (i32, i32) {
    %c0_i32 = arith.constant 0 : i32
    %c0_i32_0 = arith.constant 0 : i32
    %c0_i32_1 = arith.constant 0 : i32
    return %c0_i32, %c0_i32_0 : i32, i32
  }
  func.func @transform_3(%arg0: i32) -> (i32, i32) {
    %c0_i32 = arith.constant 0 : i32
    %c0_i32_0 = arith.constant 0 : i32
    return %arg0, %c0_i32 : i32, i32
  }
  func.func @transform_4(%arg0: i32) -> (i32, i32) {
    %c0_i32 = arith.constant 0 : i32
    %c0_i32_0 = arith.constant 0 : i32
    %c0_i32_1 = arith.constant 0 : i32
    return %c0_i32, %c0_i32_0 : i32, i32
  }
  func.func @transform_5(%arg0: i32) -> (i32, i32) {
    %c0_i32 = arith.constant 0 : i32
    %c0_i32_0 = arith.constant 0 : i32
    %c0_i32_1 = arith.constant 0 : i32
    return %c0_i32, %c0_i32_0 : i32, i32
  }
  func.func @transform_6(%arg0: i32) -> (i32, i32) {
    %c0_i32 = arith.constant 0 : i32
    %c0_i32_0 = arith.constant 0 : i32
    %c0_i32_1 = arith.constant 0 : i32
    return %c0_i32, %c0_i32_0 : i32, i32
  }
  func.func @transform_7(%arg0: i32) -> (i32, i32) {
    %c0_i32 = arith.constant 0 : i32
    %c0_i32_0 = arith.constant 0 : i32
    %c0_i32_1 = arith.constant 0 : i32
    return %c0_i32, %c0_i32_0 : i32, i32
  }
  func.func @transform_8(%arg0: i32) -> (i32, i32) {
    %c0_i32 = arith.constant 0 : i32
    %c0_i32_0 = arith.constant 0 : i32
    %c0_i32_1 = arith.constant 0 : i32
    return %c0_i32, %c0_i32_0 : i32, i32
  }
  func.func @transform_9(%arg0: i32) -> (i32, i32) {
    %c0_i32 = arith.constant 0 : i32
    %c0_i32_0 = arith.constant 0 : i32
    %c0_i32_1 = arith.constant 0 : i32
    return %c0_i32, %c0_i32_0 : i32, i32
  }
  func.func @transform_10(%arg0: i32) -> (i32, i32) {
    %c0_i32 = arith.constant 0 : i32
    %c0_i32_0 = arith.constant 0 : i32
    return %arg0, %c0_i32 : i32, i32
  }
}

</mosaic_0001>

<llo_original>
// kernel: tpu_custom_call.1
$region0: #{tpu_custom_call.1}
  #allocation0 [shape = 'u32[]', space=smem, size = 0x4, offset = 0x4, fixed_abs, tag = 'smem constant byte address 0x4 - core index']
  #allocation1 [shape = 'u32[144,128]{1,0:T(1,128)}', space=vmem, size = 0x12000, scoped, tag = 'internal scratch']
  %s0 = inlined_call_operand.hbm [shape: bf16[16,128], index: 0, kind: input, shape index: {}]
  %s1 = inlined_call_operand.hbm [shape: bf16[128,128], index: 1, kind: input, shape index: {}]
  %s2 = inlined_call_operand.vmem [shape: f32[1,128], index: 2, kind: input, shape index: {}]
  %s3 = inlined_call_operand.vmem [shape: bf16[16,128], index: 3, kind: input, shape index: {}]
  %s4 = inlined_call_operand.hbm [shape: bf16[128,128], index: 4, kind: input, shape index: {}]
  %s5 = inlined_call_operand.vmem [shape: f32[1,128], index: 5, kind: input, shape index: {}]
  %s6 = inlined_call_operand.hbm [shape: bf16[128,256], index: 6, kind: input, shape index: {}]
  %s7 = inlined_call_operand.vmem [shape: f32[1,256], index: 7, kind: input, shape index: {}]
  %s8 = inlined_call_operand.hbm [shape: bf16[256,128], index: 8, kind: input, shape index: {}]
  %s9 = inlined_call_operand.vmem [shape: f32[1,128], index: 9, kind: input, shape index: {}]
  %s10 = inlined_call_operand.hbm [shape: f32[16,128], index: 10, kind: output, shape index: {}]
  %s11 = sld [smem:[#allocation0]]
  $region70: #{tpu_custom_call.1} parent=0
    _
  %s13 = ssub.s32 1, %s11
  %s14 = scalar_select 0, %s13, %s11
  $region1: #{tpu_custom_call.1} parent=0
    #allocation2 [shape = 'u8[4096]{0}', space=vmem, size = 0x1000, scoped, tag = 'input window, operand 0, single buffered']
    #allocation3 [shape = 's32[1]{0}', space=sflag, size = 0x4, scoped, tag = 'scoped memory for tpu_custom_call.1']
    #allocation4 [shape = 's32[1]{0}', space=sflag, size = 0x4, scoped, tag = 'scoped memory for tpu_custom_call.1']
    #allocation5 [shape = 'u8[32768]{0}', space=vmem, size = 0x8000, scoped, tag = 'input window, operand 1, single buffered']
    #allocation6 [shape = 's32[1]{0}', space=sflag, size = 0x4, scoped, tag = 'scoped memory for tpu_custom_call.1']
    #allocation7 [shape = 'u8[32768]{0}', space=vmem, size = 0x8000, scoped, tag = 'input window, operand 4, single buffered']
    #allocation8 [shape = 'u8[65536]{0}', space=vmem, size = 0x10000, scoped, tag = 'input window, operand 6, single buffered']
    #allocation9 [shape = 's32[1]{0}', space=sflag, size = 0x4, scoped, tag = 'scoped memory for tpu_custom_call.1']
    #allocation10 [shape = 'u8[65536]{0}', space=vmem, size = 0x10000, scoped, tag = 'input window, operand 8, single buffered']
    #allocation11 [shape = 'u8[8192]{0}', space=vmem, size = 0x2000, scoped, tag = 'output window, operand 0, single buffered']
    %15 = vsyncpa [#allocation3], 0
    %16 = vsyncpa [#allocation6], 0
    %17 = vsyncpa [#allocation9], 0
    %18 = vsyncpa [#allocation4], 0
    // Predicated region
    $region2: #{tpu_custom_call.1} parent=1 // pred_check
      _
    $region3: #{tpu_custom_call.1} parent=1 // pred_check_branch
      %20 = sbr.rel (0) target = $region5
    $region4: #{tpu_custom_call.1} parent=1 // pred_region
      %s22 = ssub.s32 128, 128
      %23 = vsyncadd [#allocation3], %s22
      %s24 = sshll.u32 [#allocation2], 4
      %s25 = int_to_ptr.vmem [resolvable:$true] %s24
      %30 = dma.hbm_to_vmem [thread:$0]  %s0, 128, %s25, [#allocation3], 64, 64, 4
    $region5: #{tpu_custom_call.1} parent=1 // pred_fallthru
      _
    // Predicated region
    $region6: #{tpu_custom_call.1} parent=1 // pred_check
      _
    $region7: #{tpu_custom_call.1} parent=1 // pred_check_branch
      %32 = sbr.rel (0) target = $region9
    $region8: #{tpu_custom_call.1} parent=1 // pred_region
      %s34 = ssub.s32 1024, 1024
      %35 = vsyncadd [#allocation6], %s34
      %s36 = sshll.u32 [#allocation5], 4
      %s37 = int_to_ptr.vmem [resolvable:$true] %s36
      %42 = dma.hbm_to_vmem [thread:$0]  %s1, 1024, %s37, [#allocation6], 64, 64, 4
    $region9: #{tpu_custom_call.1} parent=1 // pred_fallthru
      _
    // Predicated region
    $region10: #{tpu_custom_call.1} parent=1 // pred_check
      _
    $region11: #{tpu_custom_call.1} parent=1 // pred_check_branch
      %44 = sbr.rel (0) target = $region13
    $region12: #{tpu_custom_call.1} parent=1 // pred_region
      _
    $region13: #{tpu_custom_call.1} parent=1 // pred_fallthru
      _
    // Predicated region
    $region14: #{tpu_custom_call.1} parent=1 // pred_check
      _
    $region15: #{tpu_custom_call.1} parent=1 // pred_check_branch
      %46 = sbr.rel (0) target = $region17
    $region16: #{tpu_custom_call.1} parent=1 // pred_region
      _
    $region17: #{tpu_custom_call.1} parent=1 // pred_fallthru
      _
    // Predicated region
    $region18: #{tpu_custom_call.1} parent=1 // pred_check
      _
    $region19: #{tpu_custom_call.1} parent=1 // pred_check_branch
      %48 = sbr.rel (0) target = $region21
    $region20: #{tpu_custom_call.1} parent=1 // pred_region
      %s50 = ssub.s32 1024, 1024
      %51 = vsyncadd [#allocation6], %s50
      %s52 = sshll.u32 [#allocation7], 4
      %s53 = int_to_ptr.vmem [resolvable:$true] %s52
      %58 = dma.hbm_to_vmem [thread:$0]  %s4, 1024, %s53, [#allocation6], 64, 64, 4
    $region21: #{tpu_custom_call.1} parent=1 // pred_fallthru
      _
    // Predicated region
    $region22: #{tpu_custom_call.1} parent=1 // pred_check
      _
    $region23: #{tpu_custom_call.1} parent=1 // pred_check_branch
      %60 = sbr.rel (0) target = $region25
    $region24: #{tpu_custom_call.1} parent=1 // pred_region
      _
    $region25: #{tpu_custom_call.1} parent=1 // pred_fallthru
      _
    // Predicated region
    $region26: #{tpu_custom_call.1} parent=1 // pred_check
      _
    $region27: #{tpu_custom_call.1} parent=1 // pred_check_branch
      %62 = sbr.rel (0) target = $region29
    $region28: #{tpu_custom_call.1} parent=1 // pred_region
      %s64 = ssub.s32 2048, 2048
      %65 = vsyncadd [#allocation9], %s64
      %s66 = sshll.u32 [#allocation8], 4
      %s67 = int_to_ptr.vmem [resolvable:$true] %s66
      %72 = dma.hbm_to_vmem [thread:$0]  %s6, 2048, %s67, [#allocation9], 128, 128, 8
    $region29: #{tpu_custom_call.1} parent=1 // pred_fallthru
      _
    // Predicated region
    $region30: #{tpu_custom_call.1} parent=1 // pred_check
      _
    $region31: #{tpu_custom_call.1} parent=1 // pred_check_branch
      %74 = sbr.rel (0) target = $region33
    $region32: #{tpu_custom_call.1} parent=1 // pred_region
      _
    $region33: #{tpu_custom_call.1} parent=1 // pred_fallthru
      _
    // Predicated region
    $region34: #{tpu_custom_call.1} parent=1 // pred_check
      _
    $region35: #{tpu_custom_call.1} parent=1 // pred_check_branch
      %76 = sbr.rel (0) target = $region37
    $region36: #{tpu_custom_call.1} parent=1 // pred_region
      %s78 = ssub.s32 2048, 2048
      %79 = vsyncadd [#allocation9], %s78
      %s80 = sshll.u32 [#allocation10], 4
      %s81 = int_to_ptr.vmem [resolvable:$true] %s80
      %86 = dma.hbm_to_vmem [thread:$0]  %s8, 2048, %s81, [#allocation9], 64, 64, 4
    $region37: #{tpu_custom_call.1} parent=1 // pred_fallthru
      _
    // Predicated region
    $region38: #{tpu_custom_call.1} parent=1 // pred_check
      _
    $region39: #{tpu_custom_call.1} parent=1 // pred_check_branch
      %88 = sbr.rel (0) target = $region41
    $region40: #{tpu_custom_call.1} parent=1 // pred_region
      _
    $region41: #{tpu_custom_call.1} parent=1 // pred_fallthru
      _
    // Predicated region
    $region42: #{tpu_custom_call.1} parent=1 // pred_check
      _
    $region43: #{tpu_custom_call.1} parent=1 // pred_check_branch
      %90 = sbr.rel (0) target = $region45
    $region44: #{tpu_custom_call.1} parent=1 // pred_region
      %91 = dma.done [#allocation3], 128
    $region45: #{tpu_custom_call.1} parent=1 // pred_fallthru
      _
    // Predicated region
    $region46: #{tpu_custom_call.1} parent=1 // pred_check
      _
    $region47: #{tpu_custom_call.1} parent=1 // pred_check_branch
      %93 = sbr.rel (0) target = $region49
    $region48: #{tpu_custom_call.1} parent=1 // pred_region
      %94 = dma.done [#allocation6], 1024
    $region49: #{tpu_custom_call.1} parent=1 // pred_fallthru
      _
    // Predicated region
    $region50: #{tpu_custom_call.1} parent=1 // pred_check
      _
    $region51: #{tpu_custom_call.1} parent=1 // pred_check_branch
      %96 = sbr.rel (0) target = $region53
    $region52: #{tpu_custom_call.1} parent=1 // pred_region
      %97 = dma.done [#allocation6], 1024
    $region53: #{tpu_custom_call.1} parent=1 // pred_fallthru
      _
    // Predicated region
    $region54: #{tpu_custom_call.1} parent=1 // pred_check
      _
    $region55: #{tpu_custom_call.1} parent=1 // pred_check_branch
      %99 = sbr.rel (0) target = $region57
    $region56: #{tpu_custom_call.1} parent=1 // pred_region
      %100 = dma.done [#allocation9], 2048
    $region57: #{tpu_custom_call.1} parent=1 // pred_fallthru
      _
    // Predicated region
    $region58: #{tpu_custom_call.1} parent=1 // pred_check
      _
    $region59: #{tpu_custom_call.1} parent=1 // pred_check_branch
      %102 = sbr.rel (0) target = $region61
    $region60: #{tpu_custom_call.1} parent=1 // pred_region
      %103 = dma.done [#allocation9], 2048
    $region61: #{tpu_custom_call.1} parent=1 // pred_fallthru
      _
    %v105 = vld [vmem:[#allocation2] sm:$0xf]
    %v106 = vld [vmem:[#allocation2 + $0x4] sm:$0xf]
    %v107 = vld [vmem:[#allocation5] sm:$0xf]
    %v108 = vld [vmem:[#allocation5 + $0x4] sm:$0xf]
    %v109 = vld [vmem:[#allocation5 + $0x8] sm:$0xf]
    %v110 = vld [vmem:[#allocation5 + $0xc] sm:$0xf]
    %v111 = vld [vmem:[#allocation5 + $0x10] sm:$0xf]
    %v112 = vld [vmem:[#allocation5 + $0x14] sm:$0xf]
    %v113 = vld [vmem:[#allocation5 + $0x18] sm:$0xf]
    %v114 = vld [vmem:[#allocation5 + $0x1c] sm:$0xf]
    %v115 = vld [vmem:[#allocation5 + $0x20] sm:$0xf]
    %v116 = vld [vmem:[#allocation5 + $0x24] sm:$0xf]
    %v117 = vld [vmem:[#allocation5 + $0x28] sm:$0xf]
    %v118 = vld [vmem:[#allocation5 + $0x2c] sm:$0xf]
    %v119 = vld [vmem:[#allocation5 + $0x30] sm:$0xf]
    %v120 = vld [vmem:[#allocation5 + $0x34] sm:$0xf]
    %v121 = vld [vmem:[#allocation5 + $0x38] sm:$0xf]
    %v122 = vld [vmem:[#allocation5 + $0x3c] sm:$0xf]
    %v123 = vld [vmem:[%s2] sm:$0x1]
    %v125 = vlaneseq
    %v126 = vshrl.u32 %v125, 7
    %v127 = vsub.s32 0, %v126
    %v128 = vrot.slane %v123, %v127
    %v132 = vunpack.c.l.b16 %v105
    %v133 = vunpack.c.l.b16 %v106
    %v134 = vpack.c.b16 %v133, %v132
    %v152 = vunpack.c.l.b16 %v107
    %v153 = vunpack.c.l.b16 %v108
    %v154 = vunpack.c.l.b16 %v109
    %v155 = vunpack.c.l.b16 %v110
    %v156 = vunpack.c.l.b16 %v111
    %v157 = vunpack.c.l.b16 %v112
    %v158 = vunpack.c.l.b16 %v113
    %v159 = vunpack.c.l.b16 %v114
    %v160 = vunpack.c.l.b16 %v115
    %v161 = vunpack.c.l.b16 %v116
    %v162 = vunpack.c.l.b16 %v117
    %v163 = vunpack.c.l.b16 %v118
    %v164 = vunpack.c.l.b16 %v119
    %v165 = vunpack.c.l.b16 %v120
    %v166 = vunpack.c.l.b16 %v121
    %v167 = vunpack.c.l.b16 %v122
    %v168 = vpack.c.b16 %v153, %v152
    %v169 = vpack.c.b16 %v155, %v154
    %v170 = vpack.c.b16 %v157, %v156
    %v171 = vpack.c.b16 %v159, %v158
    %v172 = vpack.c.b16 %v161, %v160
    %v173 = vpack.c.b16 %v163, %v162
    %v174 = vpack.c.b16 %v165, %v164
    %v175 = vpack.c.b16 %v167, %v166
    %184 = vmatprep.subr.bf16.mxu0 0
    %185 = vmatpush1.bf16.msra.mxu0 %v168
    %186 = vmatprep.subr.bf16.mxu0 0
    %187 = vmatpush1.bf16.msra.mxu0 %v169
    %188 = vmatprep.subr.bf16.mxu0 0
    %189 = vmatpush1.bf16.msra.mxu0 %v170
    %190 = vmatprep.subr.bf16.mxu0 0
    %191 = vmatpush1.bf16.msra.mxu0 %v171
    %192 = vmatprep.subr.bf16.mxu0 0
    %193 = vmatpush1.bf16.msra.mxu0 %v172
    %194 = vmatprep.subr.bf16.mxu0 0
    %195 = vmatpush1.bf16.msra.mxu0 %v173
    %196 = vmatprep.subr.bf16.mxu0 0
    %197 = vmatpush1.bf16.msra.mxu0 %v174
    %198 = vmatprep.subr.bf16.mxu0 0
    %199 = vmatpush1.bf16.msra.mxu0 %v175
    %200 = vmatprep.subr.bf16.mxu0 0
    %201 = vmatpush1.bf16.msra.mxu0 0
    %202 = vmatprep.subr.bf16.mxu0 0
    %203 = vmatpush1.bf16.msra.mxu0 0
    %204 = vmatprep.subr.bf16.mxu0 0
    %205 = vmatpush1.bf16.msra.mxu0 0
    %206 = vmatprep.subr.bf16.mxu0 0
    %207 = vmatpush1.bf16.msra.mxu0 0
    %208 = vmatprep.subr.bf16.mxu0 0
    %209 = vmatpush1.bf16.msra.mxu0 0
    %210 = vmatprep.subr.bf16.mxu0 0
    %211 = vmatpush1.bf16.msra.mxu0 0
    %212 = vmatprep.subr.bf16.mxu0 0
    %213 = vmatpush1.bf16.msra.mxu0 0
    %214 = vmatprep.subr.bf16.mxu0 0
    %215 = vmatpush1.bf16.msra.mxu0 0
    %216 = vmatprep.mubr.bf16.mxu0 0
    %217 = vmatmul.mubr.bf16.gmra.mrb[0].mxu0 %v134
    %v218 = vpop.f32.mrb[0].mxu0
    %v219 = vadd.f32 %v128, %v218
    %v220 = vpop.f32.mrb[0].mxu0
    %v221 = vpop.f32.mrb[0].mxu0
    %v222 = vadd.f32 %v128, %v221
    %v223 = vpop.f32.mrb[0].mxu0
    %224 = vdwg.mxu0
    %vm225 = vcmp.gt.f32.partialorder %v219, 0.0
    %vm226 = vcmp.gt.f32.partialorder %v222, 0.0
    %v227 = vmul.f32 %v219, 0.1
    %v228 = vmul.f32 %v222, 0.1
    %v229 = vsel %vm225, %v219, %v227
    %v230 = vsel %vm226, %v222, %v228
    %v231 = vld [vmem:[%s3] sm:$0xf]
    %v232 = vld [vmem:[%s3 + $0x4] sm:$0xf]
    %v233 = vld [vmem:[#allocation7] sm:$0xf]
    %v234 = vld [vmem:[#allocation7 + $0x4] sm:$0xf]
    %v235 = vld [vmem:[#allocation7 + $0x8] sm:$0xf]
    %v236 = vld [vmem:[#allocation7 + $0xc] sm:$0xf]
    %v237 = vld [vmem:[#allocation7 + $0x10] sm:$0xf]
    %v238 = vld [vmem:[#allocation7 + $0x14] sm:$0xf]
    %v239 = vld [vmem:[#allocation7 + $0x18] sm:$0xf]
    %v240 = vld [vmem:[#allocation7 + $0x1c] sm:$0xf]
    %v241 = vld [vmem:[#allocation7 + $0x20] sm:$0xf]
    %v242 = vld [vmem:[#allocation7 + $0x24] sm:$0xf]
    %v243 = vld [vmem:[#allocation7 + $0x28] sm:$0xf]
    %v244 = vld [vmem:[#allocation7 + $0x2c] sm:$0xf]
    %v245 = vld [vmem:[#allocation7 + $0x30] sm:$0xf]
    %v246 = vld [vmem:[#allocation7 + $0x34] sm:$0xf]
    %v247 = vld [vmem:[#allocation7 + $0x38] sm:$0xf]
    %v248 = vld [vmem:[#allocation7 + $0x3c] sm:$0xf]
    %v249 = vld [vmem:[%s5] sm:$0x1]
    %v251 = vlaneseq
    %v252 = vshrl.u32 %v251, 7
    %v253 = vsub.s32 0, %v252
    %v254 = vrot.slane %v249, %v253
    %v258 = vunpack.c.l.b16 %v231
    %v259 = vunpack.c.l.b16 %v232
    %v260 = vpack.c.b16 %v259, %v258
    %v278 = vunpack.c.l.b16 %v233
    %v279 = vunpack.c.l.b16 %v234
    %v280 = vunpack.c.l.b16 %v235
    %v281 = vunpack.c.l.b16 %v236
    %v282 = vunpack.c.l.b16 %v237
    %v283 = vunpack.c.l.b16 %v238
    %v284 = vunpack.c.l.b16 %v239
    %v285 = vunpack.c.l.b16 %v240
    %v286 = vunpack.c.l.b16 %v241
    %v287 = vunpack.c.l.b16 %v242
    %v288 = vunpack.c.l.b16 %v243
    %v289 = vunpack.c.l.b16 %v244
    %v290 = vunpack.c.l.b16 %v245
    %v291 = vunpack.c.l.b16 %v246
    %v292 = vunpack.c.l.b16 %v247
    %v293 = vunpack.c.l.b16 %v248
    %v294 = vpack.c.b16 %v279, %v278
    %v295 = vpack.c.b16 %v281, %v280
    %v296 = vpack.c.b16 %v283, %v282
    %v297 = vpack.c.b16 %v285, %v284
    %v298 = vpack.c.b16 %v287, %v286
    %v299 = vpack.c.b16 %v289, %v288
    %v300 = vpack.c.b16 %v291, %v290
    %v301 = vpack.c.b16 %v293, %v292
    %310 = vmatprep.subr.bf16.mxu0 0
    %311 = vmatpush1.bf16.msra.mxu0 %v294
    %312 = vmatprep.subr.bf16.mxu0 0
    %313 = vmatpush1.bf16.msra.mxu0 %v295
    %314 = vmatprep.subr.bf16.mxu0 0
    %315 = vmatpush1.bf16.msra.mxu0 %v296
    %316 = vmatprep.subr.bf16.mxu0 0
    %317 = vmatpush1.bf16.msra.mxu0 %v297
    %318 = vmatprep.subr.bf16.mxu0 0
    %319 = vmatpush1.bf16.msra.mxu0 %v298
    %320 = vmatprep.subr.bf16.mxu0 0
    %321 = vmatpush1.bf16.msra.mxu0 %v299
    %322 = vmatprep.subr.bf16.mxu0 0
    %323 = vmatpush1.bf16.msra.mxu0 %v300
    %324 = vmatprep.subr.bf16.mxu0 0
    %325 = vmatpush1.bf16.msra.mxu0 %v301
    %326 = vmatprep.subr.bf16.mxu0 0
    %327 = vmatpush1.bf16.msra.mxu0 0
    %328 = vmatprep.subr.bf16.mxu0 0
    %329 = vmatpush1.bf16.msra.mxu0 0
    %330 = vmatprep.subr.bf16.mxu0 0
    %331 = vmatpush1.bf16.msra.mxu0 0
    %332 = vmatprep.subr.bf16.mxu0 0
    %333 = vmatpush1.bf16.msra.mxu0 0
    %334 = vmatprep.subr.bf16.mxu0 0
    %335 = vmatpush1.bf16.msra.mxu0 0
    %336 = vmatprep.subr.bf16.mxu0 0
    %337 = vmatpush1.bf16.msra.mxu0 0
    %338 = vmatprep.subr.bf16.mxu0 0
    %339 = vmatpush1.bf16.msra.mxu0 0
    %340 = vmatprep.subr.bf16.mxu0 0
    %341 = vmatpush1.bf16.msra.mxu0 0
    %342 = vmatprep.mubr.bf16.mxu0 0
    %343 = vmatmul.mubr.bf16.gmra.mrb[0].mxu0 %v260
    %v344 = vpop.f32.mrb[0].mxu0
    %v345 = vadd.f32 %v254, %v344
    %v346 = vpop.f32.mrb[0].mxu0
    %v347 = vpop.f32.mrb[0].mxu0
    %v348 = vadd.f32 %v254, %v347
    %v349 = vpop.f32.mrb[0].mxu0
    %350 = vdwg.mxu0
    %vm351 = vcmp.gt.f32.partialorder %v345, 0.0
    %vm352 = vcmp.gt.f32.partialorder %v348, 0.0
    %v353 = vmul.f32 %v345, 0.1
    %v354 = vmul.f32 %v348, 0.1
    %v355 = vsel %vm351, %v345, %v353
    %v356 = vsel %vm352, %v348, %v354
    %v357 = vmax.f32 %v229, %v355
    %v358 = vmax.f32 %v230, %v356
    %v359 = vpack.c.bf16 %v358, %v357
    %v360 = vld [vmem:[#allocation8] sm:$0xff]
    %v361 = vld [vmem:[#allocation8 + $0x8] sm:$0xff]
    %v362 = vld [vmem:[#allocation8 + $0x10] sm:$0xff]
    %v363 = vld [vmem:[#allocation8 + $0x18] sm:$0xff]
    %v364 = vld [vmem:[#allocation8 + $0x20] sm:$0xff]
    %v365 = vld [vmem:[#allocation8 + $0x28] sm:$0xff]
    %v366 = vld [vmem:[#allocation8 + $0x30] sm:$0xff]
    %v367 = vld [vmem:[#allocation8 + $0x38] sm:$0xff]
    %v368 = vld [vmem:[#allocation8 + $0x40] sm:$0xff]
    %v369 = vld [vmem:[#allocation8 + $0x48] sm:$0xff]
    %v370 = vld [vmem:[#allocation8 + $0x50] sm:$0xff]
    %v371 = vld [vmem:[#allocation8 + $0x58] sm:$0xff]
    %v372 = vld [vmem:[#allocation8 + $0x60] sm:$0xff]
    %v373 = vld [vmem:[#allocation8 + $0x68] sm:$0xff]
    %v374 = vld [vmem:[#allocation8 + $0x70] sm:$0xff]
    %v375 = vld [vmem:[#allocation8 + $0x78] sm:$0xff]
    %v376 = vld [vmem:[%s7] sm:$0x3]
    %v378 = vlaneseq
    %v379 = vshrl.u32 %v378, 7
    %v380 = vsub.s32 0, %v379
    %v381 = vrot.slane %v376, %v380
    %v382 = vlaneseq
    %v383 = vshrl.u32 %v382, 7
    %v384 = vsub.s32 1, %v383
    %v385 = vrot.slane %v376, %v384
    %v404 = vunpack.c.l.b16 %v360
    %v405 = vunpack.c.h.b16 %v360
    %v406 = vunpack.c.l.b16 %v361
    %v407 = vunpack.c.h.b16 %v361
    %v408 = vunpack.c.l.b16 %v362
    %v409 = vunpack.c.h.b16 %v362
    %v410 = vunpack.c.l.b16 %v363
    %v411 = vunpack.c.h.b16 %v363
    %v412 = vunpack.c.l.b16 %v364
    %v413 = vunpack.c.h.b16 %v364
    %v414 = vunpack.c.l.b16 %v365
    %v415 = vunpack.c.h.b16 %v365
    %v416 = vunpack.c.l.b16 %v366
    %v417 = vunpack.c.h.b16 %v366
    %v418 = vunpack.c.l.b16 %v367
    %v419 = vunpack.c.h.b16 %v367
    %v420 = vunpack.c.l.b16 %v368
    %v421 = vunpack.c.h.b16 %v368
    %v422 = vunpack.c.l.b16 %v369
    %v423 = vunpack.c.h.b16 %v369
    %v424 = vunpack.c.l.b16 %v370
    %v425 = vunpack.c.h.b16 %v370
    %v426 = vunpack.c.l.b16 %v371
    %v427 = vunpack.c.h.b16 %v371
    %v428 = vunpack.c.l.b16 %v372
    %v429 = vunpack.c.h.b16 %v372
    %v430 = vunpack.c.l.b16 %v373
    %v431 = vunpack.c.h.b16 %v373
    %v432 = vunpack.c.l.b16 %v374
    %v433 = vunpack.c.h.b16 %v374
    %v434 = vunpack.c.l.b16 %v375
    %v435 = vunpack.c.h.b16 %v375
    %v436 = vpack.c.b16 %v406, %v404
    %v437 = vpack.c.b16 %v407, %v405
    %v438 = vpack.c.b16 %v410, %v408
    %v439 = vpack.c.b16 %v411, %v409
    %v440 = vpack.c.b16 %v414, %v412
    %v441 = vpack.c.b16 %v415, %v413
    %v442 = vpack.c.b16 %v418, %v416
    %v443 = vpack.c.b16 %v419, %v417
    %v444 = vpack.c.b16 %v422, %v420
    %v445 = vpack.c.b16 %v423, %v421
    %v446 = vpack.c.b16 %v426, %v424
    %v447 = vpack.c.b16 %v427, %v425
    %v448 = vpack.c.b16 %v430, %v428
    %v449 = vpack.c.b16 %v431, %v429
    %v450 = vpack.c.b16 %v434, %v432
    %v451 = vpack.c.b16 %v435, %v433
    %468 = vmatprep.subr.bf16.mxu0 %v437
    %469 = vmatpush1.bf16.msra.mxu0 %v436
    %470 = vmatprep.subr.bf16.mxu0 %v439
    %471 = vmatpush1.bf16.msra.mxu0 %v438
    %472 = vmatprep.subr.bf16.mxu0 %v441
    %473 = vmatpush1.bf16.msra.mxu0 %v440
    %474 = vmatprep.subr.bf16.mxu0 %v443
    %475 = vmatpush1.bf16.msra.mxu0 %v442
    %476 = vmatprep.subr.bf16.mxu0 %v445
    %477 = vmatpush1.bf16.msra.mxu0 %v444
    %478 = vmatprep.subr.bf16.mxu0 %v447
    %479 = vmatpush1.bf16.msra.mxu0 %v446
    %480 = vmatprep.subr.bf16.mxu0 %v449
    %481 = vmatpush1.bf16.msra.mxu0 %v448
    %482 = vmatprep.subr.bf16.mxu0 %v451
    %483 = vmatpush1.bf16.msra.mxu0 %v450
    %484 = vmatprep.subr.bf16.mxu0 0
    %485 = vmatpush1.bf16.msra.mxu0 0
    %486 = vmatprep.subr.bf16.mxu0 0
    %487 = vmatpush1.bf16.msra.mxu0 0
    %488 = vmatprep.subr.bf16.mxu0 0
    %489 = vmatpush1.bf16.msra.mxu0 0
    %490 = vmatprep.subr.bf16.mxu0 0
    %491 = vmatpush1.bf16.msra.mxu0 0
    %492 = vmatprep.subr.bf16.mxu0 0
    %493 = vmatpush1.bf16.msra.mxu0 0
    %494 = vmatprep.subr.bf16.mxu0 0
    %495 = vmatpush1.bf16.msra.mxu0 0
    %496 = vmatprep.subr.bf16.mxu0 0
    %497 = vmatpush1.bf16.msra.mxu0 0
    %498 = vmatprep.subr.bf16.mxu0 0
    %499 = vmatpush1.bf16.msra.mxu0 0
    %500 = vmatprep.mubr.bf16.mxu0 0
    %501 = vmatmul.mubr.bf16.gmra.mrb[0].mxu0 %v359
    %v502 = vpop.f32.mrb[0].mxu0
    %v503 = vadd.f32 %v381, %v502
    %v504 = vpop.f32.mrb[0].mxu0
    %v505 = vadd.f32 %v385, %v504
    %v506 = vpop.f32.mrb[0].mxu0
    %v507 = vadd.f32 %v381, %v506
    %v508 = vpop.f32.mrb[0].mxu0
    %v509 = vadd.f32 %v385, %v508
    %510 = vdwg.mxu0
    %vm511 = vcmp.gt.f32.partialorder %v503, 0.0
    %vm512 = vcmp.gt.f32.partialorder %v505, 0.0
    %vm513 = vcmp.gt.f32.partialorder %v507, 0.0
    %vm514 = vcmp.gt.f32.partialorder %v509, 0.0
    %v515 = vmul.f32 %v503, 0.1
    %v516 = vmul.f32 %v505, 0.1
    %v517 = vmul.f32 %v507, 0.1
    %v518 = vmul.f32 %v509, 0.1
    %v519 = vsel %vm511, %v503, %v515
    %v520 = vsel %vm512, %v505, %v516
    %v521 = vsel %vm513, %v507, %v517
    %v522 = vsel %vm514, %v509, %v518
    %v523 = vpack.c.bf16 %v521, %v519
    %v524 = vpack.c.bf16 %v522, %v520
    %v525 = vld [vmem:[#allocation10] sm:$0xf]
    %v526 = vld [vmem:[#allocation10 + $0x4] sm:$0xf]
    %v527 = vld [vmem:[#allocation10 + $0x8] sm:$0xf]
    %v528 = vld [vmem:[#allocation10 + $0xc] sm:$0xf]
    %v529 = vld [vmem:[#allocation10 + $0x10] sm:$0xf]
    %v530 = vld [vmem:[#allocation10 + $0x14] sm:$0xf]
    %v531 = vld [vmem:[#allocation10 + $0x18] sm:$0xf]
    %v532 = vld [vmem:[#allocation10 + $0x1c] sm:$0xf]
    %v533 = vld [vmem:[#allocation10 + $0x20] sm:$0xf]
    %v534 = vld [vmem:[#allocation10 + $0x24] sm:$0xf]
    %v535 = vld [vmem:[#allocation10 + $0x28] sm:$0xf]
    %v536 = vld [vmem:[#allocation10 + $0x2c] sm:$0xf]
    %v537 = vld [vmem:[#allocation10 + $0x30] sm:$0xf]
    %v538 = vld [vmem:[#allocation10 + $0x34] sm:$0xf]
    %v539 = vld [vmem:[#allocation10 + $0x38] sm:$0xf]
    %v540 = vld [vmem:[#allocation10 + $0x3c] sm:$0xf]
    %v541 = vld [vmem:[#allocation10 + $0x40] sm:$0xf]
    %v542 = vld [vmem:[#allocation10 + $0x44] sm:$0xf]
    %v543 = vld [vmem:[#allocation10 + $0x48] sm:$0xf]
    %v544 = vld [vmem:[#allocation10 + $0x4c] sm:$0xf]
    %v545 = vld [vmem:[#allocation10 + $0x50] sm:$0xf]
    %v546 = vld [vmem:[#allocation10 + $0x54] sm:$0xf]
    %v547 = vld [vmem:[#allocation10 + $0x58] sm:$0xf]
    %v548 = vld [vmem:[#allocation10 + $0x5c] sm:$0xf]
    %v549 = vld [vmem:[#allocation10 + $0x60] sm:$0xf]
    %v550 = vld [vmem:[#allocation10 + $0x64] sm:$0xf]
    %v551 = vld [vmem:[#allocation10 + $0x68] sm:$0xf]
    %v552 = vld [vmem:[#allocation10 + $0x6c] sm:$0xf]
    %v553 = vld [vmem:[#allocation10 + $0x70] sm:$0xf]
    %v554 = vld [vmem:[#allocation10 + $0x74] sm:$0xf]
    %v555 = vld [vmem:[#allocation10 + $0x78] sm:$0xf]
    %v556 = vld [vmem:[#allocation10 + $0x7c] sm:$0xf]
    %v557 = vld [vmem:[%s9] sm:$0x1]
    %v559 = vlaneseq
    %v560 = vshrl.u32 %v559, 7
    %v561 = vsub.s32 0, %v560
    %v562 = vrot.slane %v557, %v561
    %v596 = vunpack.c.l.b16 %v525
    %v597 = vunpack.c.l.b16 %v526
    %v598 = vunpack.c.l.b16 %v527
    %v599 = vunpack.c.l.b16 %v528
    %v600 = vunpack.c.l.b16 %v529
    %v601 = vunpack.c.l.b16 %v530
    %v602 = vunpack.c.l.b16 %v531
    %v603 = vunpack.c.l.b16 %v532
    %v604 = vunpack.c.l.b16 %v533
    %v605 = vunpack.c.l.b16 %v534
    %v606 = vunpack.c.l.b16 %v535
    %v607 = vunpack.c.l.b16 %v536
    %v608 = vunpack.c.l.b16 %v537
    %v609 = vunpack.c.l.b16 %v538
    %v610 = vunpack.c.l.b16 %v539
    %v611 = vunpack.c.l.b16 %v540
    %v612 = vunpack.c.l.b16 %v541
    %v613 = vunpack.c.l.b16 %v542
    %v614 = vunpack.c.l.b16 %v543
    %v615 = vunpack.c.l.b16 %v544
    %v616 = vunpack.c.l.b16 %v545
    %v617 = vunpack.c.l.b16 %v546
    %v618 = vunpack.c.l.b16 %v547
    %v619 = vunpack.c.l.b16 %v548
    %v620 = vunpack.c.l.b16 %v549
    %v621 = vunpack.c.l.b16 %v550
    %v622 = vunpack.c.l.b16 %v551
    %v623 = vunpack.c.l.b16 %v552
    %v624 = vunpack.c.l.b16 %v553
    %v625 = vunpack.c.l.b16 %v554
    %v626 = vunpack.c.l.b16 %v555
    %v627 = vunpack.c.l.b16 %v556
    %v628 = vpack.c.b16 %v597, %v596
    %v629 = vpack.c.b16 %v599, %v598
    %v630 = vpack.c.b16 %v601, %v600
    %v631 = vpack.c.b16 %v603, %v602
    %v632 = vpack.c.b16 %v605, %v604
    %v633 = vpack.c.b16 %v607, %v606
    %v634 = vpack.c.b16 %v609, %v608
    %v635 = vpack.c.b16 %v611, %v610
    %v636 = vpack.c.b16 %v613, %v612
    %v637 = vpack.c.b16 %v615, %v614
    %v638 = vpack.c.b16 %v617, %v616
    %v639 = vpack.c.b16 %v619, %v618
    %v640 = vpack.c.b16 %v621, %v620
    %v641 = vpack.c.b16 %v623, %v622
    %v642 = vpack.c.b16 %v625, %v624
    %v643 = vpack.c.b16 %v627, %v626
    %660 = vmatprep.subr.bf16.mxu0 0
    %661 = vmatpush1.bf16.msra.mxu0 %v628
    %662 = vmatprep.subr.bf16.mxu0 0
    %663 = vmatpush1.bf16.msra.mxu0 %v629
    %664 = vmatprep.subr.bf16.mxu0 0
    %665 = vmatpush1.bf16.msra.mxu0 %v630
    %666 = vmatprep.subr.bf16.mxu0 0
    %667 = vmatpush1.bf16.msra.mxu0 %v631
    %668 = vmatprep.subr.bf16.mxu0 0
    %669 = vmatpush1.bf16.msra.mxu0 %v632
    %670 = vmatprep.subr.bf16.mxu0 0
    %671 = vmatpush1.bf16.msra.mxu0 %v633
    %672 = vmatprep.subr.bf16.mxu0 0
    %673 = vmatpush1.bf16.msra.mxu0 %v634
    %674 = vmatprep.subr.bf16.mxu0 0
    %675 = vmatpush1.bf16.msra.mxu0 %v635
    %676 = vmatprep.subr.bf16.mxu0 0
    %677 = vmatpush1.bf16.msra.mxu0 %v636
    %678 = vmatprep.subr.bf16.mxu0 0
    %679 = vmatpush1.bf16.msra.mxu0 %v637
    %680 = vmatprep.subr.bf16.mxu0 0
    %681 = vmatpush1.bf16.msra.mxu0 %v638
    %682 = vmatprep.subr.bf16.mxu0 0
    %683 = vmatpush1.bf16.msra.mxu0 %v639
    %684 = vmatprep.subr.bf16.mxu0 0
    %685 = vmatpush1.bf16.msra.mxu0 %v640
    %686 = vmatprep.subr.bf16.mxu0 0
    %687 = vmatpush1.bf16.msra.mxu0 %v641
    %688 = vmatprep.subr.bf16.mxu0 0
    %689 = vmatpush1.bf16.msra.mxu0 %v642
    %690 = vmatprep.subr.bf16.mxu0 0
    %691 = vmatpush1.bf16.msra.mxu0 %v643
    %692 = vmatprep.mubr.bf16.mxu0 %v524
    %693 = vmatmul.mubr.bf16.gmra.mrb[0].mxu0 %v523
    %v694 = vpop.f32.mrb[0].mxu0
    %v695 = vadd.f32 %v562, %v694
    %v696 = vpop.f32.mrb[0].mxu0
    %v697 = vpop.f32.mrb[0].mxu0
    %v698 = vadd.f32 %v562, %v697
    %v699 = vpop.f32.mrb[0].mxu0
    %700 = vdwg.mxu0
    %v701 = vmax.f32 %v695, 0.0
    %v702 = vmax.f32 %v698, 0.0
    %703 = vst [vmem:[#allocation11] sm:$0xff] %v701
    %704 = vst [vmem:[#allocation11 + $0x8] sm:$0xff] %v702
    // Predicated region
    $region62: #{tpu_custom_call.1} parent=1 // pred_check
      _
    $region63: #{tpu_custom_call.1} parent=1 // pred_check_branch
      %706 = sbr.rel (0) target = $region65
    $region64: #{tpu_custom_call.1} parent=1 // pred_region
      %s708 = ssub.s32 256, 256
      %709 = vsyncadd [#allocation4], %s708
      %s710 = sshll.u32 [#allocation11], 4
      %s711 = int_to_ptr.vmem [resolvable:$true] %s710
      %716 = dma.vmem_to_hbm [thread:$0]  %s711, 256, %s10, [#allocation4], 128, 128, 8
    $region65: #{tpu_custom_call.1} parent=1 // pred_fallthru
      _
    // Predicated region
    $region66: #{tpu_custom_call.1} parent=1 // pred_check
      _
    $region67: #{tpu_custom_call.1} parent=1 // pred_check_branch
      %718 = sbr.rel (0) target = $region69
    $region68: #{tpu_custom_call.1} parent=1 // pred_region
      %719 = dma.done [#allocation4], 256
    $region69: #{tpu_custom_call.1} parent=1 // pred_fallthru
      _
    %720 = vsyncpa [#allocation3], 1
    %721 = vsyncpa [#allocation6], 1
    %722 = vsyncpa [#allocation9], 1
    %723 = vsyncpa [#allocation4], 1

</llo_original>
